<compile_context>
chip_gen: v5e
topology: v5e:2x2
jax: 0.10.0
libtpu: 0.0.40
codegen_flags: <defaults>
</compile_context>

<pallas_src>
import functools

import jax
import jax.numpy as jnp
import numpy as np
from jax.experimental import pallas as pl
from jax.experimental.pallas import tpu as pltpu

K = 3          # 3x3 convs, padding=1 (SAME)
TAP_PAD = 8    # sublane-aligned rows per conv2 tap in the flattened weight


def _refine_kernel(H, W,
                   xcol_ref, w1_ref, b1_ref, w2_ref, b2_ref, xi_ref, yi_ref,
                   o_ref):
    # xcol_ref: (K*K*Cin, N)        im2col'd input (pixels in lanes), N = B*H*W
    # w1_ref  : (Chid, K*K*Cin)     conv1 weight, flat
    # b1_ref  : (Chid, 1)           conv1 bias (f32)
    # w2_ref  : (K*K*TAP_PAD, Chid) conv2 weight, 8 rows per tap (rows >=Cout zero)
    # b2_ref  : (TAP_PAD, 1)        conv2 bias padded with zeros (f32)
    # xi_ref  : (1, N) int32        per-pixel x coordinate
    # yi_ref  : (1, N) int32        per-pixel y coordinate
    # o_ref   : (TAP_PAD, N)        lane-dense output, channels in rows 0..Cout-1
    N = xcol_ref.shape[1]

    # ---- conv1: one MXU matmul over the im2col'd input ----------------------
    h = jnp.dot(w1_ref[...], xcol_ref[...],
                preferred_element_type=jnp.float32)          # (Chid, N) f32
    h = jnp.maximum(h + b1_ref[...], 0.0)                    # bias + ReLU (VPU, f32)

    # ---- conv2: matmul-then-shift -------------------------------------------
    # One MXU matmul gives every tap contribution:
    #   T[t*8 + c, p] = sum_k w2[dy,dx,k,c] * hidden[k, p]   (rows t*8+Cout.. are 0)
    t_all = jnp.dot(w2_ref[...], h.astype(w2_ref.dtype),
                    preferred_element_type=jnp.float32)      # (9*TAP_PAD, N) f32

    # Edge-validity masks (pixels live in the lane axis); computed once.
    y8 = jnp.broadcast_to(yi_ref[...], (TAP_PAD, N))
    x8 = jnp.broadcast_to(xi_ref[...], (TAP_PAD, N))
    y_ok = {0: y8 >= 1, 2: y8 <= H - 2}                      # dy=1 always valid
    x_ok = {0: x8 >= 1, 2: x8 <= W - 2}                      # dx=1 always valid

    def shift_lanes(a, off):
        # out[:, p] = a[:, (p + off) % N]; wrap-around lanes are always masked.
        k = off % N
        if k == 0:
            return a
        return jnp.concatenate([a[:, k:], a[:, :k]], axis=1)

    acc = jnp.zeros((TAP_PAD, N), dtype=jnp.float32)
    for dy in range(K):
        for dx in range(K):
            t = dy * K + dx
            off = (dy - 1) * W + (dx - 1)
            tap = t_all[t * TAP_PAD:(t + 1) * TAP_PAD, :]    # vreg-aligned slice
            shifted = shift_lanes(tap, off)
            row_m = y_ok.get(dy)
            col_m = x_ok.get(dx)
            if row_m is None and col_m is None:              # center tap
                contrib = shifted
            else:
                if row_m is None:
                    valid = col_m
                elif col_m is None:
                    valid = row_m
                else:
                    valid = jnp.logical_and(row_m, col_m)
                contrib = jnp.where(valid, shifted, 0.0)
            acc = acc + contrib

    # bias (padded rows of b2 are zero) + lane-dense store (unmasked vst)
    o_ref[...] = (acc + b2_ref[...]).astype(o_ref.dtype)


def refinement_net_forward(x_nchw, w1_hwio, b1, w2_hwio, b2,
                           mxu_dtype=jnp.float32):
    """RefinementNet forward.  x_nchw: (B, 3, H, W) f32 -> (B, 3, H, W) f32."""
    B, Cin, H, W = x_nchw.shape
    Chid = w1_hwio.shape[3]
    Cout = w2_hwio.shape[3]
    N = B * H * W

    # ---- one fused im2col pass, built directly from NCHW --------------------
    xp = jnp.pad(x_nchw, ((0, 0), (0, 0), (1, 1), (1, 1)))
    taps = [xp[:, :, dy:dy + H, dx:dx + W]                   # each (B, Cin, H, W)
            for dy in range(K) for dx in range(K)]
    xcolT = (jnp.stack(taps, axis=0)                         # (9, B, Cin, H, W)
             .transpose(0, 2, 1, 3, 4)                       # (9, Cin, B, H, W)
             .reshape(K * K * Cin, N)                        # rows: t*Cin + ci
             .astype(mxu_dtype))

    # ---- flat, lane-friendly weights ----------------------------------------
    # conv1: (Chid, 27), columns ordered (dy, dx, ci) to match xcolT rows.
    w1t = jnp.transpose(w1_hwio, (3, 0, 1, 2)).reshape(Chid, K * K * Cin)
    w1t = w1t.astype(mxu_dtype)
    # conv2: 8 sublane-aligned rows per tap; row t*8+c holds w2[dy,dx,:,c].
    w2r = jnp.transpose(w2_hwio, (0, 1, 3, 2)).reshape(K * K, Cout, Chid)
    w2pad = jnp.zeros((K * K, TAP_PAD, Chid), w2r.dtype).at[:, :Cout, :].set(w2r)
    w2pad = w2pad.reshape(K * K * TAP_PAD, Chid).astype(mxu_dtype)

    b1c = b1.reshape(Chid, 1).astype(jnp.float32)
    b2pad = jnp.zeros((TAP_PAD, 1), jnp.float32).at[:Cout, 0].set(b2)

    # per-pixel (lane) coordinates for the conv2 edge masks
    pix = jnp.arange(N, dtype=jnp.int32) % (H * W)
    yi = (pix // W).reshape(1, N)
    xi = (pix % W).reshape(1, N)

    kernel = functools.partial(_refine_kernel, H, W)

    out_k = pl.pallas_call(
        kernel,
        out_shape=jax.ShapeDtypeStruct((TAP_PAD, N), jnp.float32),
        grid=(1,),
        in_specs=[
            pl.BlockSpec((K * K * Cin, N), lambda i: (0, 0)),
            pl.BlockSpec((Chid, K * K * Cin), lambda i: (0, 0)),
            pl.BlockSpec((Chid, 1), lambda i: (0, 0)),
            pl.BlockSpec((K * K * TAP_PAD, Chid), lambda i: (0, 0)),
            pl.BlockSpec((TAP_PAD, 1), lambda i: (0, 0)),
            pl.BlockSpec((1, N), lambda i: (0, 0)),
            pl.BlockSpec((1, N), lambda i: (0, 0)),
        ],
        out_specs=pl.BlockSpec((TAP_PAD, N), lambda i: (0, 0)),
        compiler_params=pltpu.CompilerParams(
            dimension_semantics=("arbitrary",)),
    )(xcolT, w1t, b1c, w2pad, b2pad, xi, yi)

    # rows 0..Cout-1 hold the channels; lanes are (b, y, x) -> tiny epilogue.
    return out_k[:Cout].reshape(Cout, B, H, W).transpose(1, 0, 2, 3)


if __name__ == "__main__":
    key = jax.random.PRNGKey(0)
    k_x, k_w1, k_b1, k_w2, k_b2 = jax.random.split(key, 5)

    B, Cin, H, W = 2, 3, 16, 16   # input [B, 3, H, W] like the PyTorch module
    Chid, Cout = 64, 3

    # Deterministic synthetic parameters (shapes from RefinementNet.__init__).
    x = jax.random.normal(k_x, (B, Cin, H, W), dtype=jnp.float32)
    w1 = jax.random.normal(k_w1, (K, K, Cin, Chid), dtype=jnp.float32) * 0.1
    b1 = jax.random.normal(k_b1, (Chid,), dtype=jnp.float32) * 0.1
    w2 = jax.random.normal(k_w2, (K, K, Chid, Cout), dtype=jnp.float32) * 0.1
    b2 = jax.random.normal(k_b2, (Cout,), dtype=jnp.float32) * 0.1

    out = jax.block_until_ready(refinement_net_forward(x, w1, b1, w2, b2))

    # Reference forward pass via XLA conv (NCHW / OIHW, same as nn.Conv2d).
    def ref_forward(x, w1, b1, w2, b2):
        w1_oihw = jnp.transpose(w1, (3, 2, 0, 1))
        w2_oihw = jnp.transpose(w2, (3, 2, 0, 1))
        h = jax.lax.conv_general_dilated(
            x, w1_oihw, (1, 1), 'SAME',
            dimension_numbers=('NCHW', 'OIHW', 'NCHW'))
        h = jnp.maximum(h + b1[None, :, None, None], 0.0)
        y = jax.lax.conv_general_dilated(
            h, w2_oihw, (1, 1), 'SAME',
            dimension_numbers=('NCHW', 'OIHW', 'NCHW'))
        return y + b2[None, :, None, None]

    expected = jax.block_until_ready(ref_forward(x, w1, b1, w2, b2))
    assert out.shape == (B, Cout, H, W)
    assert np.allclose(np.asarray(out), np.asarray(expected),
                       atol=1e-3, rtol=1e-3)
    print("KERNEL_OK")
</pallas_src>

<mosaic_0001>
module attributes {stable_mosaic.version = 11 : i64} {
  func.func @_refine_kernel(%arg0: i32, %arg1: memref<27x512xf32, #tpu.memory_space<vmem>>, %arg2: memref<64x27xf32, #tpu.memory_space<vmem>>, %arg3: memref<64x1xf32, #tpu.memory_space<vmem>>, %arg4: memref<72x64xf32, #tpu.memory_space<vmem>>, %arg5: memref<8x1xf32, #tpu.memory_space<vmem>>, %arg6: memref<1x512xi32, #tpu.memory_space<vmem>>, %arg7: memref<1x512xi32, #tpu.memory_space<vmem>>, %arg8: memref<8x512xf32, #tpu.memory_space<vmem>>) attributes {dimension_semantics = [#tpu.dimension_semantics<arbitrary>], iteration_bounds = array<i64: 1>, scalar_prefetch = 0 : i64, scratch_operands = 0 : i64, tpu.core_type = #tpu.core_type<tc>, window_params = [{pipeline_mode = #tpu.pipeline_mode<synchronous>, transform_indices = @transform_0, window_bounds = array<i64: 27, 512>}, {pipeline_mode = #tpu.pipeline_mode<synchronous>, transform_indices = @transform_1, window_bounds = array<i64: 64, 27>}, {pipeline_mode = #tpu.pipeline_mode<synchronous>, transform_indices = @transform_2, window_bounds = array<i64: 64, 1>}, {pipeline_mode = #tpu.pipeline_mode<synchronous>, transform_indices = @transform_3, window_bounds = array<i64: 72, 64>}, {pipeline_mode = #tpu.pipeline_mode<synchronous>, transform_indices = @transform_4, window_bounds = array<i64: 8, 1>}, {pipeline_mode = #tpu.pipeline_mode<synchronous>, transform_indices = @transform_5, window_bounds = array<i64: 1, 512>}, {pipeline_mode = #tpu.pipeline_mode<synchronous>, transform_indices = @transform_6, window_bounds = array<i64: 1, 512>}, {pipeline_mode = #tpu.pipeline_mode<synchronous>, transform_indices = @transform_7, window_bounds = array<i64: 8, 512>}]} {
    %c0 = arith.constant 0 : index
    %c0_0 = arith.constant 0 : index
    %0 = vector.load %arg2[%c0, %c0_0] : memref<64x27xf32, #tpu.memory_space<vmem>>, vector<64x27xf32>
    %c0_1 = arith.constant 0 : index
    %c0_2 = arith.constant 0 : index
    %1 = vector.load %arg1[%c0_1, %c0_2] : memref<27x512xf32, #tpu.memory_space<vmem>>, vector<27x512xf32>
    %cst = arith.constant dense<0.000000e+00> : vector<64x512xf32>
    %2 = tpu.matmul %0, %1, %cst {dimension_numbers = #tpu.dot_dimension_numbers<[1], [0], [0], [1], [0, 0, 1, 1], [], []>} : vector<64x27xf32>, vector<27x512xf32>, vector<64x512xf32> -> vector<64x512xf32>
    %c0_3 = arith.constant 0 : index
    %c0_4 = arith.constant 0 : index
    %3 = vector.load %arg3[%c0_3, %c0_4] : memref<64x1xf32, #tpu.memory_space<vmem>>, vector<64x1xf32>
    %4 = vector.broadcast %3 : vector<64x1xf32> to vector<64x512xf32>
    %5 = arith.addf %2, %4 : vector<64x512xf32>
    %cst_5 = arith.constant 0.000000e+00 : f32
    %6 = vector.broadcast %cst_5 : f32 to vector<64x512xf32>
    %7 = arith.maximumf %5, %6 : vector<64x512xf32>
    %c0_6 = arith.constant 0 : index
    %c0_7 = arith.constant 0 : index
    %8 = vector.load %arg4[%c0_6, %c0_7] : memref<72x64xf32, #tpu.memory_space<vmem>>, vector<72x64xf32>
    %cst_8 = arith.constant dense<0.000000e+00> : vector<72x512xf32>
    %9 = tpu.matmul %8, %7, %cst_8 {dimension_numbers = #tpu.dot_dimension_numbers<[1], [0], [0], [1], [0, 0, 1, 1], [], []>} : vector<72x64xf32>, vector<64x512xf32>, vector<72x512xf32> -> vector<72x512xf32>
    %c0_9 = arith.constant 0 : index
    %c0_10 = arith.constant 0 : index
    %10 = vector.load %arg7[%c0_9, %c0_10] : memref<1x512xi32, #tpu.memory_space<vmem>>, vector<1x512xi32>
    %11 = vector.shape_cast %10 : vector<1x512xi32> to vector<1x512xi32>
    %12 = vector.broadcast %11 : vector<1x512xi32> to vector<8x512xi32>
    %c0_11 = arith.constant 0 : index
    %c0_12 = arith.constant 0 : index
    %13 = vector.load %arg6[%c0_11, %c0_12] : memref<1x512xi32, #tpu.memory_space<vmem>>, vector<1x512xi32>
    %14 = vector.shape_cast %13 : vector<1x512xi32> to vector<1x512xi32>
    %15 = vector.broadcast %14 : vector<1x512xi32> to vector<8x512xi32>
    %c1_i32 = arith.constant 1 : i32
    %16 = vector.broadcast %c1_i32 : i32 to vector<8x512xi32>
    %17 = arith.cmpi sge, %12, %16 : vector<8x512xi32>
    %c14_i32 = arith.constant 14 : i32
    %18 = vector.broadcast %c14_i32 : i32 to vector<8x512xi32>
    %19 = arith.cmpi sle, %12, %18 : vector<8x512xi32>
    %c1_i32_13 = arith.constant 1 : i32
    %20 = vector.broadcast %c1_i32_13 : i32 to vector<8x512xi32>
    %21 = arith.cmpi sge, %15, %20 : vector<8x512xi32>
    %c14_i32_14 = arith.constant 14 : i32
    %22 = vector.broadcast %c14_i32_14 : i32 to vector<8x512xi32>
    %23 = arith.cmpi sle, %15, %22 : vector<8x512xi32>
    %cst_15 = arith.constant 0.000000e+00 : f32
    %24 = vector.broadcast %cst_15 : f32 to vector<8x512xf32>
    %25 = vector.extract_strided_slice %9 {offsets = [0, 0], sizes = [8, 512], strides = [1, 1]} : vector<72x512xf32> to vector<8x512xf32>
    %26 = vector.extract_strided_slice %25 {offsets = [0, 495], sizes = [8, 17], strides = [1, 1]} : vector<8x512xf32> to vector<8x17xf32>
    %27 = vector.extract_strided_slice %25 {offsets = [0, 0], sizes = [8, 495], strides = [1, 1]} : vector<8x512xf32> to vector<8x495xf32>
    %28 = tpu.concatenate %26, %27 in 1 : vector<8x17xf32>, vector<8x495xf32> -> vector<8x512xf32>
    %29 = arith.andi %17, %21 : vector<8x512xi1>
    %cst_16 = arith.constant 0.000000e+00 : f32
    %30 = vector.broadcast %cst_16 : f32 to vector<8x512xf32>
    %31 = arith.select %29, %28, %30 : vector<8x512xi1>, vector<8x512xf32>
    %32 = arith.addf %24, %31 : vector<8x512xf32>
    %33 = vector.extract_strided_slice %9 {offsets = [8, 0], sizes = [8, 512], strides = [1, 1]} : vector<72x512xf32> to vector<8x512xf32>
    %34 = vector.extract_strided_slice %33 {offsets = [0, 496], sizes = [8, 16], strides = [1, 1]} : vector<8x512xf32> to vector<8x16xf32>
    %35 = vector.extract_strided_slice %33 {offsets = [0, 0], sizes = [8, 496], strides = [1, 1]} : vector<8x512xf32> to vector<8x496xf32>
    %36 = tpu.concatenate %34, %35 in 1 : vector<8x16xf32>, vector<8x496xf32> -> vector<8x512xf32>
    %cst_17 = arith.constant 0.000000e+00 : f32
    %37 = vector.broadcast %cst_17 : f32 to vector<8x512xf32>
    %38 = arith.select %17, %36, %37 : vector<8x512xi1>, vector<8x512xf32>
    %39 = arith.addf %32, %38 : vector<8x512xf32>
    %40 = vector.extract_strided_slice %9 {offsets = [16, 0], sizes = [8, 512], strides = [1, 1]} : vector<72x512xf32> to vector<8x512xf32>
    %41 = vector.extract_strided_slice %40 {offsets = [0, 497], sizes = [8, 15], strides = [1, 1]} : vector<8x512xf32> to vector<8x15xf32>
    %42 = vector.extract_strided_slice %40 {offsets = [0, 0], sizes = [8, 497], strides = [1, 1]} : vector<8x512xf32> to vector<8x497xf32>
    %43 = tpu.concatenate %41, %42 in 1 : vector<8x15xf32>, vector<8x497xf32> -> vector<8x512xf32>
    %44 = arith.andi %17, %23 : vector<8x512xi1>
    %cst_18 = arith.constant 0.000000e+00 : f32
    %45 = vector.broadcast %cst_18 : f32 to vector<8x512xf32>
    %46 = arith.select %44, %43, %45 : vector<8x512xi1>, vector<8x512xf32>
    %47 = arith.addf %39, %46 : vector<8x512xf32>
    %48 = vector.extract_strided_slice %9 {offsets = [24, 0], sizes = [8, 512], strides = [1, 1]} : vector<72x512xf32> to vector<8x512xf32>
    %49 = vector.extract_strided_slice %48 {offsets = [0, 511], sizes = [8, 1], strides = [1, 1]} : vector<8x512xf32> to vector<8x1xf32>
    %50 = vector.extract_strided_slice %48 {offsets = [0, 0], sizes = [8, 511], strides = [1, 1]} : vector<8x512xf32> to vector<8x511xf32>
    %51 = tpu.concatenate %49, %50 in 1 : vector<8x1xf32>, vector<8x511xf32> -> vector<8x512xf32>
    %cst_19 = arith.constant 0.000000e+00 : f32
    %52 = vector.broadcast %cst_19 : f32 to vector<8x512xf32>
    %53 = arith.select %21, %51, %52 : vector<8x512xi1>, vector<8x512xf32>
    %54 = arith.addf %47, %53 : vector<8x512xf32>
    %55 = vector.extract_strided_slice %9 {offsets = [32, 0], sizes = [8, 512], strides = [1, 1]} : vector<72x512xf32> to vector<8x512xf32>
    %56 = arith.addf %54, %55 : vector<8x512xf32>
    %57 = vector.extract_strided_slice %9 {offsets = [40, 0], sizes = [8, 512], strides = [1, 1]} : vector<72x512xf32> to vector<8x512xf32>
    %58 = vector.extract_strided_slice %57 {offsets = [0, 1], sizes = [8, 511], strides = [1, 1]} : vector<8x512xf32> to vector<8x511xf32>
    %59 = vector.extract_strided_slice %57 {offsets = [0, 0], sizes = [8, 1], strides = [1, 1]} : vector<8x512xf32> to vector<8x1xf32>
    %60 = tpu.concatenate %58, %59 in 1 : vector<8x511xf32>, vector<8x1xf32> -> vector<8x512xf32>
    %cst_20 = arith.constant 0.000000e+00 : f32
    %61 = vector.broadcast %cst_20 : f32 to vector<8x512xf32>
    %62 = arith.select %23, %60, %61 : vector<8x512xi1>, vector<8x512xf32>
    %63 = arith.addf %56, %62 : vector<8x512xf32>
    %64 = vector.extract_strided_slice %9 {offsets = [48, 0], sizes = [8, 512], strides = [1, 1]} : vector<72x512xf32> to vector<8x512xf32>
    %65 = vector.extract_strided_slice %64 {offsets = [0, 15], sizes = [8, 497], strides = [1, 1]} : vector<8x512xf32> to vector<8x497xf32>
    %66 = vector.extract_strided_slice %64 {offsets = [0, 0], sizes = [8, 15], strides = [1, 1]} : vector<8x512xf32> to vector<8x15xf32>
    %67 = tpu.concatenate %65, %66 in 1 : vector<8x497xf32>, vector<8x15xf32> -> vector<8x512xf32>
    %68 = arith.andi %19, %21 : vector<8x512xi1>
    %cst_21 = arith.constant 0.000000e+00 : f32
    %69 = vector.broadcast %cst_21 : f32 to vector<8x512xf32>
    %70 = arith.select %68, %67, %69 : vector<8x512xi1>, vector<8x512xf32>
    %71 = arith.addf %63, %70 : vector<8x512xf32>
    %72 = vector.extract_strided_slice %9 {offsets = [56, 0], sizes = [8, 512], strides = [1, 1]} : vector<72x512xf32> to vector<8x512xf32>
    %73 = vector.extract_strided_slice %72 {offsets = [0, 16], sizes = [8, 496], strides = [1, 1]} : vector<8x512xf32> to vector<8x496xf32>
    %74 = vector.extract_strided_slice %72 {offsets = [0, 0], sizes = [8, 16], strides = [1, 1]} : vector<8x512xf32> to vector<8x16xf32>
    %75 = tpu.concatenate %73, %74 in 1 : vector<8x496xf32>, vector<8x16xf32> -> vector<8x512xf32>
    %cst_22 = arith.constant 0.000000e+00 : f32
    %76 = vector.broadcast %cst_22 : f32 to vector<8x512xf32>
    %77 = arith.select %19, %75, %76 : vector<8x512xi1>, vector<8x512xf32>
    %78 = arith.addf %71, %77 : vector<8x512xf32>
    %79 = vector.extract_strided_slice %9 {offsets = [64, 0], sizes = [8, 512], strides = [1, 1]} : vector<72x512xf32> to vector<8x512xf32>
    %80 = vector.extract_strided_slice %79 {offsets = [0, 17], sizes = [8, 495], strides = [1, 1]} : vector<8x512xf32> to vector<8x495xf32>
    %81 = vector.extract_strided_slice %79 {offsets = [0, 0], sizes = [8, 17], strides = [1, 1]} : vector<8x512xf32> to vector<8x17xf32>
    %82 = tpu.concatenate %80, %81 in 1 : vector<8x495xf32>, vector<8x17xf32> -> vector<8x512xf32>
    %83 = arith.andi %19, %23 : vector<8x512xi1>
    %cst_23 = arith.constant 0.000000e+00 : f32
    %84 = vector.broadcast %cst_23 : f32 to vector<8x512xf32>
    %85 = arith.select %83, %82, %84 : vector<8x512xi1>, vector<8x512xf32>
    %86 = arith.addf %78, %85 : vector<8x512xf32>
    %c0_24 = arith.constant 0 : index
    %c0_25 = arith.constant 0 : index
    %87 = vector.load %arg5[%c0_24, %c0_25] : memref<8x1xf32, #tpu.memory_space<vmem>>, vector<8x1xf32>
    %88 = vector.broadcast %87 : vector<8x1xf32> to vector<8x512xf32>
    %89 = arith.addf %86, %88 : vector<8x512xf32>
    %c0_26 = arith.constant 0 : index
    %c0_27 = arith.constant 0 : index
    %90 = vector.load %arg8[%c0_26, %c0_27] : memref<8x512xf32, #tpu.memory_space<vmem>>, vector<8x512xf32>
    tpu.vector_store %arg8[%c0_26, %c0_27], %89 {strides = array<i32>} : memref<8x512xf32, #tpu.memory_space<vmem>>, vector<8x512xf32>,
    return
  }
  func.func @transform_0(%arg0: i32) -> (i32, i32) {
    %c0_i32 = arith.constant 0 : i32
    %c0_i32_0 = arith.constant 0 : i32
    %c0_i32_1 = arith.constant 0 : i32
    return %c0_i32, %c0_i32_0 : i32, i32
  }
  func.func @transform_1(%arg0: i32) -> (i32, i32) {
    %c0_i32 = arith.constant 0 : i32
    %c0_i32_0 = arith.constant 0 : i32
    %c0_i32_1 = arith.constant 0 : i32
    return %c0_i32, %c0_i32_0 : i32, i32
  }
  func.func @transform_2(%arg0: i32) -> (i32, i32) {
    %c0_i32 = arith.constant 0 : i32
    %c0_i32_0 = arith.constant 0 : i32
    %c0_i32_1 = arith.constant 0 : i32
    return %c0_i32, %c0_i32_0 : i32, i32
  }
  func.func @transform_3(%arg0: i32) -> (i32, i32) {
    %c0_i32 = arith.constant 0 : i32
    %c0_i32_0 = arith.constant 0 : i32
    %c0_i32_1 = arith.constant 0 : i32
    return %c0_i32, %c0_i32_0 : i32, i32
  }
  func.func @transform_4(%arg0: i32) -> (i32, i32) {
    %c0_i32 = arith.constant 0 : i32
    %c0_i32_0 = arith.constant 0 : i32
    %c0_i32_1 = arith.constant 0 : i32
    return %c0_i32, %c0_i32_0 : i32, i32
  }
  func.func @transform_5(%arg0: i32) -> (i32, i32) {
    %c0_i32 = arith.constant 0 : i32
    %c0_i32_0 = arith.constant 0 : i32
    %c0_i32_1 = arith.constant 0 : i32
    return %c0_i32, %c0_i32_0 : i32, i32
  }
  func.func @transform_6(%arg0: i32) -> (i32, i32) {
    %c0_i32 = arith.constant 0 : i32
    %c0_i32_0 = arith.constant 0 : i32
    %c0_i32_1 = arith.constant 0 : i32
    return %c0_i32, %c0_i32_0 : i32, i32
  }
  func.func @transform_7(%arg0: i32) -> (i32, i32) {
    %c0_i32 = arith.constant 0 : i32
    %c0_i32_0 = arith.constant 0 : i32
    %c0_i32_1 = arith.constant 0 : i32
    return %c0_i32, %c0_i32_0 : i32, i32
  }
}

</mosaic_0001>

<llo_original>
// kernel: tpu_custom_call.1
$region0: #{tpu_custom_call.1}
  #allocation0 [shape = 'u32[]', space=smem, size = 0x4, offset = 0x4, fixed_abs, tag = 'smem constant byte address 0x4 - core index']
  #allocation1 [shape = 'u32[72,128]{1,0:T(1,128)}', space=vmem, size = 0x9000, scoped, tag = 'internal scratch']
  %s0 = inlined_call_operand.vmem [shape: f32[27,512], index: 0, kind: input, shape index: {}]
  %s1 = inlined_call_operand.vmem [shape: f32[64,27], index: 1, kind: input, shape index: {}]
  %s2 = inlined_call_operand.vmem [shape: f32[64,1], index: 2, kind: input, shape index: {}]
  %s3 = inlined_call_operand.vmem [shape: f32[72,64], index: 3, kind: input, shape index: {}]
  %s4 = inlined_call_operand.vmem [shape: f32[8,1], index: 4, kind: input, shape index: {}]
  %s5 = inlined_call_operand.vmem [shape: s32[1,512], index: 5, kind: input, shape index: {}]
  %s6 = inlined_call_operand.vmem [shape: s32[1,512], index: 6, kind: input, shape index: {}]
  %s7 = inlined_call_operand.hbm [shape: f32[8,512], index: 7, kind: output, shape index: {}]
  %s8 = sld [smem:[#allocation0]]
  $region38: #{tpu_custom_call.1} parent=0
    _
  %s10 = ssub.s32 1, %s8
  %s11 = scalar_select 0, %s10, %s8
  $region1: #{tpu_custom_call.1} parent=0
    #allocation2 [shape = 'u8[16384]{0}', space=vmem, size = 0x4000, scoped, tag = 'output window, operand 0, single buffered']
    #allocation3 [shape = 's32[1]{0}', space=sflag, size = 0x4, scoped, tag = 'scoped memory for tpu_custom_call.1']
    %12 = vsyncpa [#allocation3], 0
    // Predicated region
    $region2: #{tpu_custom_call.1} parent=1 // pred_check
      _
    $region3: #{tpu_custom_call.1} parent=1 // pred_check_branch
      %14 = sbr.rel (0) target = $region5
    $region4: #{tpu_custom_call.1} parent=1 // pred_region
      _
    $region5: #{tpu_custom_call.1} parent=1 // pred_fallthru
      _
    // Predicated region
    $region6: #{tpu_custom_call.1} parent=1 // pred_check
      _
    $region7: #{tpu_custom_call.1} parent=1 // pred_check_branch
      %16 = sbr.rel (0) target = $region9
    $region8: #{tpu_custom_call.1} parent=1 // pred_region
      _
    $region9: #{tpu_custom_call.1} parent=1 // pred_fallthru
      _
    // Predicated region
    $region10: #{tpu_custom_call.1} parent=1 // pred_check
      _
    $region11: #{tpu_custom_call.1} parent=1 // pred_check_branch
      %18 = sbr.rel (0) target = $region13
    $region12: #{tpu_custom_call.1} parent=1 // pred_region
      _
    $region13: #{tpu_custom_call.1} parent=1 // pred_fallthru
      _
    // Predicated region
    $region14: #{tpu_custom_call.1} parent=1 // pred_check
      _
    $region15: #{tpu_custom_call.1} parent=1 // pred_check_branch
      %20 = sbr.rel (0) target = $region17
    $region16: #{tpu_custom_call.1} parent=1 // pred_region
      _
    $region17: #{tpu_custom_call.1} parent=1 // pred_fallthru
      _
    // Predicated region
    $region18: #{tpu_custom_call.1} parent=1 // pred_check
      _
    $region19: #{tpu_custom_call.1} parent=1 // pred_check_branch
      %22 = sbr.rel (0) target = $region21
    $region20: #{tpu_custom_call.1} parent=1 // pred_region
      _
    $region21: #{tpu_custom_call.1} parent=1 // pred_fallthru
      _
    // Predicated region
    $region22: #{tpu_custom_call.1} parent=1 // pred_check
      _
    $region23: #{tpu_custom_call.1} parent=1 // pred_check_branch
      %24 = sbr.rel (0) target = $region25
    $region24: #{tpu_custom_call.1} parent=1 // pred_region
      _
    $region25: #{tpu_custom_call.1} parent=1 // pred_fallthru
      _
    // Predicated region
    $region26: #{tpu_custom_call.1} parent=1 // pred_check
      _
    $region27: #{tpu_custom_call.1} parent=1 // pred_check_branch
      %26 = sbr.rel (0) target = $region29
    $region28: #{tpu_custom_call.1} parent=1 // pred_region
      _
    $region29: #{tpu_custom_call.1} parent=1 // pred_fallthru
      _
    %v27 = vld [vmem:[%s1] sm:$0xff]
    %v28 = vld [vmem:[%s1 + $0x8] sm:$0xff]
    %v29 = vld [vmem:[%s1 + $0x10] sm:$0xff]
    %v30 = vld [vmem:[%s1 + $0x18] sm:$0xff]
    %v31 = vld [vmem:[%s1 + $0x20] sm:$0xff]
    %v32 = vld [vmem:[%s1 + $0x28] sm:$0xff]
    %v33 = vld [vmem:[%s1 + $0x30] sm:$0xff]
    %v34 = vld [vmem:[%s1 + $0x38] sm:$0xff]
    %v35 = vld [vmem:[%s0] sm:$0xff]
    %v36 = vld [vmem:[%s0 + $0x8] sm:$0xff]
    %v37 = vld [vmem:[%s0 + $0x10] sm:$0xff]
    %v38 = vld [vmem:[%s0 + $0x18] sm:$0xff]
    %v39 = vld [vmem:[%s0 + $0x20] sm:$0xff]
    %v40 = vld [vmem:[%s0 + $0x28] sm:$0xff]
    %v41 = vld [vmem:[%s0 + $0x30] sm:$0xff]
    %v42 = vld [vmem:[%s0 + $0x38] sm:$0xff]
    %v43 = vld [vmem:[%s0 + $0x40] sm:$0xff]
    %v44 = vld [vmem:[%s0 + $0x48] sm:$0xff]
    %v45 = vld [vmem:[%s0 + $0x50] sm:$0xff]
    %v46 = vld [vmem:[%s0 + $0x58] sm:$0xff]
    %v47 = vld [vmem:[%s0 + $0x60] sm:$0x7]
    %v48 = vld [vmem:[%s0 + $0x68] sm:$0x7]
    %v49 = vld [vmem:[%s0 + $0x70] sm:$0x7]
    %v50 = vld [vmem:[%s0 + $0x78] sm:$0x7]
    %v51 = vld [vmem:[%s2] sm:$0xff]
    %v52 = vld [vmem:[%s2 + $0x8] sm:$0xff]
    %v53 = vld [vmem:[%s2 + $0x10] sm:$0xff]
    %v54 = vld [vmem:[%s2 + $0x18] sm:$0xff]
    %v55 = vld [vmem:[%s2 + $0x20] sm:$0xff]
    %v56 = vld [vmem:[%s2 + $0x28] sm:$0xff]
    %v57 = vld [vmem:[%s2 + $0x30] sm:$0xff]
    %v58 = vld [vmem:[%s2 + $0x38] sm:$0xff]
    %60 = vset.pattern.permute.xlu0 0
    %61 = vperm.xlu0 %60, %v51
    %v62 = vpop.permute.xlu0 %61
    %65 = vset.pattern.permute.xlu0 0
    %66 = vperm.xlu0 %65, %v52
    %v67 = vpop.permute.xlu0 %66
    %70 = vset.pattern.permute.xlu0 0
    %71 = vperm.xlu0 %70, %v53
    %v72 = vpop.permute.xlu0 %71
    %75 = vset.pattern.permute.xlu0 0
    %76 = vperm.xlu0 %75, %v54
    %v77 = vpop.permute.xlu0 %76
    %80 = vset.pattern.permute.xlu0 0
    %81 = vperm.xlu0 %80, %v55
    %v82 = vpop.permute.xlu0 %81
    %85 = vset.pattern.permute.xlu0 0
    %86 = vperm.xlu0 %85, %v56
    %v87 = vpop.permute.xlu0 %86
    %90 = vset.pattern.permute.xlu0 0
    %91 = vperm.xlu0 %90, %v57
    %v92 = vpop.permute.xlu0 %91
    %95 = vset.pattern.permute.xlu0 0
    %96 = vperm.xlu0 %95, %v58
    %v97 = vpop.permute.xlu0 %96
    %vm99 = vcmask 220160
    %v101 = vsel %vm99, %v27, 0
    %v104 = vsel %vm99, %v28, 0
    %v107 = vsel %vm99, %v29, 0
    %v110 = vsel %vm99, %v30, 0
    %v113 = vsel %vm99, %v31, 0
    %v116 = vsel %vm99, %v32, 0
    %v119 = vsel %vm99, %v33, 0
    %v122 = vsel %vm99, %v34, 0
    %vm124 = vcmask 1042432
    %v126 = vsel %vm124, %v47, 0
    %v129 = vsel %vm124, %v48, 0
    %v132 = vsel %vm124, %v49, 0
    %v135 = vsel %vm124, %v50, 0
    %137 = vmatpush.msra.mxu0 0.0
    %138 = vmatpush.msra.mxu0 0.0
    %139 = vmatpush.msra.mxu0 0.0
    %140 = vmatpush.msra.mxu0 0.0
    %141 = vmatpush.msra.mxu0 0.0
    %142 = vmatpush.msra.mxu0 0.0
    %143 = vmatpush.msra.mxu0 0.0
    %144 = vmatpush.msra.mxu0 0.0
    %145 = vmatpush.msra.mxu0 0.0
    %146 = vmatpush.msra.mxu0 0.0
    %147 = vmatpush.msra.mxu0 0.0
    %148 = vmatpush.msra.mxu0 0.0
    %149 = vmatpush.msra.mxu0 %v126
    %150 = vmatpush.msra.mxu0 %v43
    %151 = vmatpush.msra.mxu0 %v39
    %152 = vmatpush.msra.mxu0 %v35
    %153 = vmatmul.f32.gmra.mxu0 %v101
    %v154 = vpop.f32.mrf.mxu0
    %v155 = vadd.f32 %v62, %v154
    %156 = vmatmul.f32.gmra.mxu0 %v104
    %v157 = vpop.f32.mrf.mxu0
    %v158 = vadd.f32 %v67, %v157
    %159 = vmatmul.f32.gmra.mxu0 %v107
    %v160 = vpop.f32.mrf.mxu0
    %v161 = vadd.f32 %v72, %v160
    %162 = vmatmul.f32.gmra.mxu0 %v110
    %v163 = vpop.f32.mrf.mxu0
    %v164 = vadd.f32 %v77, %v163
    %165 = vmatmul.f32.gmra.mxu0 %v113
    %v166 = vpop.f32.mrf.mxu0
    %v167 = vadd.f32 %v82, %v166
    %168 = vmatmul.f32.gmra.mxu0 %v116
    %v169 = vpop.f32.mrf.mxu0
    %v170 = vadd.f32 %v87, %v169
    %171 = vmatmul.f32.gmra.mxu0 %v119
    %v172 = vpop.f32.mrf.mxu0
    %v173 = vadd.f32 %v92, %v172
    %174 = vmatmul.f32.gmra.mxu0 %v122
    %v175 = vpop.f32.mrf.mxu0
    %v176 = vadd.f32 %v97, %v175
    %177 = vdwg.mxu0
    %178 = vmatpush.msra.mxu0 0.0
    %179 = vmatpush.msra.mxu0 0.0
    %180 = vmatpush.msra.mxu0 0.0
    %181 = vmatpush.msra.mxu0 0.0
    %182 = vmatpush.msra.mxu0 0.0
    %183 = vmatpush.msra.mxu0 0.0
    %184 = vmatpush.msra.mxu0 0.0
    %185 = vmatpush.msra.mxu0 0.0
    %186 = vmatpush.msra.mxu0 0.0
    %187 = vmatpush.msra.mxu0 0.0
    %188 = vmatpush.msra.mxu0 0.0
    %189 = vmatpush.msra.mxu0 0.0
    %190 = vmatpush.msra.mxu0 %v129
    %191 = vmatpush.msra.mxu0 %v44
    %192 = vmatpush.msra.mxu0 %v40
    %193 = vmatpush.msra.mxu0 %v36
    %194 = vmatmul.f32.gmra.mxu0 %v101
    %v195 = vpop.f32.mrf.mxu0
    %v196 = vadd.f32 %v62, %v195
    %197 = vmatmul.f32.gmra.mxu0 %v104
    %v198 = vpop.f32.mrf.mxu0
    %v199 = vadd.f32 %v67, %v198
    %200 = vmatmul.f32.gmra.mxu0 %v107
    %v201 = vpop.f32.mrf.mxu0
    %v202 = vadd.f32 %v72, %v201
    %203 = vmatmul.f32.gmra.mxu0 %v110
    %v204 = vpop.f32.mrf.mxu0
    %v205 = vadd.f32 %v77, %v204
    %206 = vmatmul.f32.gmra.mxu0 %v113
    %v207 = vpop.f32.mrf.mxu0
    %v208 = vadd.f32 %v82, %v207
    %209 = vmatmul.f32.gmra.mxu0 %v116
    %v210 = vpop.f32.mrf.mxu0
    %v211 = vadd.f32 %v87, %v210
    %212 = vmatmul.f32.gmra.mxu0 %v119
    %v213 = vpop.f32.mrf.mxu0
    %v214 = vadd.f32 %v92, %v213
    %215 = vmatmul.f32.gmra.mxu0 %v122
    %v216 = vpop.f32.mrf.mxu0
    %v217 = vadd.f32 %v97, %v216
    %218 = vdwg.mxu0
    %219 = vmatpush.msra.mxu0 0.0
    %220 = vmatpush.msra.mxu0 0.0
    %221 = vmatpush.msra.mxu0 0.0
    %222 = vmatpush.msra.mxu0 0.0
    %223 = vmatpush.msra.mxu0 0.0
    %224 = vmatpush.msra.mxu0 0.0
    %225 = vmatpush.msra.mxu0 0.0
    %226 = vmatpush.msra.mxu0 0.0
    %227 = vmatpush.msra.mxu0 0.0
    %228 = vmatpush.msra.mxu0 0.0
    %229 = vmatpush.msra.mxu0 0.0
    %230 = vmatpush.msra.mxu0 0.0
    %231 = vmatpush.msra.mxu0 %v132
    %232 = vmatpush.msra.mxu0 %v45
    %233 = vmatpush.msra.mxu0 %v41
    %234 = vmatpush.msra.mxu0 %v37
    %235 = vmatmul.f32.gmra.mxu0 %v101
    %v236 = vpop.f32.mrf.mxu0
    %v237 = vadd.f32 %v62, %v236
    %238 = vmatmul.f32.gmra.mxu0 %v104
    %v239 = vpop.f32.mrf.mxu0
    %v240 = vadd.f32 %v67, %v239
    %241 = vmatmul.f32.gmra.mxu0 %v107
    %v242 = vpop.f32.mrf.mxu0
    %v243 = vadd.f32 %v72, %v242
    %244 = vmatmul.f32.gmra.mxu0 %v110
    %v245 = vpop.f32.mrf.mxu0
    %v246 = vadd.f32 %v77, %v245
    %247 = vmatmul.f32.gmra.mxu0 %v113
    %v248 = vpop.f32.mrf.mxu0
    %v249 = vadd.f32 %v82, %v248
    %250 = vmatmul.f32.gmra.mxu0 %v116
    %v251 = vpop.f32.mrf.mxu0
    %v252 = vadd.f32 %v87, %v251
    %253 = vmatmul.f32.gmra.mxu0 %v119
    %v254 = vpop.f32.mrf.mxu0
    %v255 = vadd.f32 %v92, %v254
    %256 = vmatmul.f32.gmra.mxu0 %v122
    %v257 = vpop.f32.mrf.mxu0
    %v258 = vadd.f32 %v97, %v257
    %259 = vdwg.mxu0
    %260 = vmatpush.msra.mxu0 0.0
    %261 = vmatpush.msra.mxu0 0.0
    %262 = vmatpush.msra.mxu0 0.0
    %263 = vmatpush.msra.mxu0 0.0
    %264 = vmatpush.msra.mxu0 0.0
    %265 = vmatpush.msra.mxu0 0.0
    %266 = vmatpush.msra.mxu0 0.0
    %267 = vmatpush.msra.mxu0 0.0
    %268 = vmatpush.msra.mxu0 0.0
    %269 = vmatpush.msra.mxu0 0.0
    %270 = vmatpush.msra.mxu0 0.0
    %271 = vmatpush.msra.mxu0 0.0
    %272 = vmatpush.msra.mxu0 %v135
    %273 = vmatpush.msra.mxu0 %v46
    %274 = vmatpush.msra.mxu0 %v42
    %275 = vmatpush.msra.mxu0 %v38
    %276 = vmatmul.f32.gmra.mxu0 %v101
    %v277 = vpop.f32.mrf.mxu0
    %v278 = vadd.f32 %v62, %v277
    %279 = vmatmul.f32.gmra.mxu0 %v104
    %v280 = vpop.f32.mrf.mxu0
    %v281 = vadd.f32 %v67, %v280
    %282 = vmatmul.f32.gmra.mxu0 %v107
    %v283 = vpop.f32.mrf.mxu0
    %v284 = vadd.f32 %v72, %v283
    %285 = vmatmul.f32.gmra.mxu0 %v110
    %v286 = vpop.f32.mrf.mxu0
    %v287 = vadd.f32 %v77, %v286
    %288 = vmatmul.f32.gmra.mxu0 %v113
    %v289 = vpop.f32.mrf.mxu0
    %v290 = vadd.f32 %v82, %v289
    %291 = vmatmul.f32.gmra.mxu0 %v116
    %v292 = vpop.f32.mrf.mxu0
    %v293 = vadd.f32 %v87, %v292
    %294 = vmatmul.f32.gmra.mxu0 %v119
    %v295 = vpop.f32.mrf.mxu0
    %v296 = vadd.f32 %v92, %v295
    %297 = vmatmul.f32.gmra.mxu0 %v122
    %v298 = vpop.f32.mrf.mxu0
    %v299 = vadd.f32 %v97, %v298
    %300 = vdwg.mxu0
    %v301 = vmax.f32 %v155, 0.0
    %v302 = vmax.f32 %v196, 0.0
    %v303 = vmax.f32 %v237, 0.0
    %v304 = vmax.f32 %v278, 0.0
    %v305 = vmax.f32 %v158, 0.0
    %v306 = vmax.f32 %v199, 0.0
    %v307 = vmax.f32 %v240, 0.0
    %v308 = vmax.f32 %v281, 0.0
    %v309 = vmax.f32 %v161, 0.0
    %v310 = vmax.f32 %v202, 0.0
    %v311 = vmax.f32 %v243, 0.0
    %v312 = vmax.f32 %v284, 0.0
    %v313 = vmax.f32 %v164, 0.0
    %v314 = vmax.f32 %v205, 0.0
    %v315 = vmax.f32 %v246, 0.0
    %v316 = vmax.f32 %v287, 0.0
    %v317 = vmax.f32 %v167, 0.0
    %v318 = vmax.f32 %v208, 0.0
    %v319 = vmax.f32 %v249, 0.0
    %v320 = vmax.f32 %v290, 0.0
    %v321 = vmax.f32 %v170, 0.0
    %v322 = vmax.f32 %v211, 0.0
    %v323 = vmax.f32 %v252, 0.0
    %v324 = vmax.f32 %v293, 0.0
    %v325 = vmax.f32 %v173, 0.0
    %v326 = vmax.f32 %v214, 0.0
    %v327 = vmax.f32 %v255, 0.0
    %v328 = vmax.f32 %v296, 0.0
    %v329 = vmax.f32 %v176, 0.0
    %v330 = vmax.f32 %v217, 0.0
    %v331 = vmax.f32 %v258, 0.0
    %v332 = vmax.f32 %v299, 0.0
    %v333 = vld [vmem:[%s3] sm:$0xff]
    %v334 = vld [vmem:[%s3 + $0x8] sm:$0xff]
    %v335 = vld [vmem:[%s3 + $0x10] sm:$0xff]
    %v336 = vld [vmem:[%s3 + $0x18] sm:$0xff]
    %v337 = vld [vmem:[%s3 + $0x20] sm:$0xff]
    %v338 = vld [vmem:[%s3 + $0x28] sm:$0xff]
    %v339 = vld [vmem:[%s3 + $0x30] sm:$0xff]
    %v340 = vld [vmem:[%s3 + $0x38] sm:$0xff]
    %v341 = vld [vmem:[%s3 + $0x40] sm:$0xff]
    %vm342 = vcmask 523264
    %v344 = vsel %vm342, %v333, 0
    %v347 = vsel %vm342, %v334, 0
    %v350 = vsel %vm342, %v335, 0
    %v353 = vsel %vm342, %v336, 0
    %v356 = vsel %vm342, %v337, 0
    %v359 = vsel %vm342, %v338, 0
    %v362 = vsel %vm342, %v339, 0
    %v365 = vsel %vm342, %v340, 0
    %v368 = vsel %vm342, %v341, 0
    %370 = vmatpush.msra.mxu0 0.0
    %371 = vmatpush.msra.mxu0 0.0
    %372 = vmatpush.msra.mxu0 0.0
    %373 = vmatpush.msra.mxu0 0.0
    %374 = vmatpush.msra.mxu0 0.0
    %375 = vmatpush.msra.mxu0 0.0
    %376 = vmatpush.msra.mxu0 0.0
    %377 = vmatpush.msra.mxu0 0.0
    %378 = vmatpush.msra.mxu0 %v329
    %379 = vmatpush.msra.mxu0 %v325
    %380 = vmatpush.msra.mxu0 %v321
    %381 = vmatpush.msra.mxu0 %v317
    %382 = vmatpush.msra.mxu0 %v313
    %383 = vmatpush.msra.mxu0 %v309
    %384 = vmatpush.msra.mxu0 %v305
    %385 = vmatpush.msra.mxu0 %v301
    %386 = vmatmul.f32.gmra.mxu0 %v344
    %v387 = vpop.f32.mrf.mxu0
    %v388 = vadd.f32 0.0, %v387
    %389 = vmatmul.f32.gmra.mxu0 %v347
    %v390 = vpop.f32.mrf.mxu0
    %v391 = vadd.f32 0.0, %v390
    %392 = vmatmul.f32.gmra.mxu0 %v350
    %v393 = vpop.f32.mrf.mxu0
    %v394 = vadd.f32 0.0, %v393
    %395 = vmatmul.f32.gmra.mxu0 %v353
    %v396 = vpop.f32.mrf.mxu0
    %v397 = vadd.f32 0.0, %v396
    %398 = vmatmul.f32.gmra.mxu0 %v356
    %v399 = vpop.f32.mrf.mxu0
    %v400 = vadd.f32 0.0, %v399
    %401 = vmatmul.f32.gmra.mxu0 %v359
    %v402 = vpop.f32.mrf.mxu0
    %v403 = vadd.f32 0.0, %v402
    %404 = vmatmul.f32.gmra.mxu0 %v362
    %v405 = vpop.f32.mrf.mxu0
    %v406 = vadd.f32 0.0, %v405
    %407 = vmatmul.f32.gmra.mxu0 %v365
    %v408 = vpop.f32.mrf.mxu0
    %v409 = vadd.f32 0.0, %v408
    %410 = vmatmul.f32.gmra.mxu0 %v368
    %v411 = vpop.f32.mrf.mxu0
    %v412 = vadd.f32 0.0, %v411
    %413 = vdwg.mxu0
    %414 = vmatpush.msra.mxu0 0.0
    %415 = vmatpush.msra.mxu0 0.0
    %416 = vmatpush.msra.mxu0 0.0
    %417 = vmatpush.msra.mxu0 0.0
    %418 = vmatpush.msra.mxu0 0.0
    %419 = vmatpush.msra.mxu0 0.0
    %420 = vmatpush.msra.mxu0 0.0
    %421 = vmatpush.msra.mxu0 0.0
    %422 = vmatpush.msra.mxu0 %v330
    %423 = vmatpush.msra.mxu0 %v326
    %424 = vmatpush.msra.mxu0 %v322
    %425 = vmatpush.msra.mxu0 %v318
    %426 = vmatpush.msra.mxu0 %v314
    %427 = vmatpush.msra.mxu0 %v310
    %428 = vmatpush.msra.mxu0 %v306
    %429 = vmatpush.msra.mxu0 %v302
    %430 = vmatmul.f32.gmra.mxu0 %v344
    %v431 = vpop.f32.mrf.mxu0
    %v432 = vadd.f32 0.0, %v431
    %433 = vmatmul.f32.gmra.mxu0 %v347
    %v434 = vpop.f32.mrf.mxu0
    %v435 = vadd.f32 0.0, %v434
    %436 = vmatmul.f32.gmra.mxu0 %v350
    %v437 = vpop.f32.mrf.mxu0
    %v438 = vadd.f32 0.0, %v437
    %439 = vmatmul.f32.gmra.mxu0 %v353
    %v440 = vpop.f32.mrf.mxu0
    %v441 = vadd.f32 0.0, %v440
    %442 = vmatmul.f32.gmra.mxu0 %v356
    %v443 = vpop.f32.mrf.mxu0
    %v444 = vadd.f32 0.0, %v443
    %445 = vmatmul.f32.gmra.mxu0 %v359
    %v446 = vpop.f32.mrf.mxu0
    %v447 = vadd.f32 0.0, %v446
    %448 = vmatmul.f32.gmra.mxu0 %v362
    %v449 = vpop.f32.mrf.mxu0
    %v450 = vadd.f32 0.0, %v449
    %451 = vmatmul.f32.gmra.mxu0 %v365
    %v452 = vpop.f32.mrf.mxu0
    %v453 = vadd.f32 0.0, %v452
    %454 = vmatmul.f32.gmra.mxu0 %v368
    %v455 = vpop.f32.mrf.mxu0
    %v456 = vadd.f32 0.0, %v455
    %457 = vdwg.mxu0
    %458 = vmatpush.msra.mxu0 0.0
    %459 = vmatpush.msra.mxu0 0.0
    %460 = vmatpush.msra.mxu0 0.0
    %461 = vmatpush.msra.mxu0 0.0
    %462 = vmatpush.msra.mxu0 0.0
    %463 = vmatpush.msra.mxu0 0.0
    %464 = vmatpush.msra.mxu0 0.0
    %465 = vmatpush.msra.mxu0 0.0
    %466 = vmatpush.msra.mxu0 %v331
    %467 = vmatpush.msra.mxu0 %v327
    %468 = vmatpush.msra.mxu0 %v323
    %469 = vmatpush.msra.mxu0 %v319
    %470 = vmatpush.msra.mxu0 %v315
    %471 = vmatpush.msra.mxu0 %v311
    %472 = vmatpush.msra.mxu0 %v307
    %473 = vmatpush.msra.mxu0 %v303
    %474 = vmatmul.f32.gmra.mxu0 %v344
    %v475 = vpop.f32.mrf.mxu0
    %v476 = vadd.f32 0.0, %v475
    %477 = vmatmul.f32.gmra.mxu0 %v347
    %v478 = vpop.f32.mrf.mxu0
    %v479 = vadd.f32 0.0, %v478
    %480 = vmatmul.f32.gmra.mxu0 %v350
    %v481 = vpop.f32.mrf.mxu0
    %v482 = vadd.f32 0.0, %v481
    %483 = vmatmul.f32.gmra.mxu0 %v353
    %v484 = vpop.f32.mrf.mxu0
    %v485 = vadd.f32 0.0, %v484
    %486 = vmatmul.f32.gmra.mxu0 %v356
    %v487 = vpop.f32.mrf.mxu0
    %v488 = vadd.f32 0.0, %v487
    %489 = vmatmul.f32.gmra.mxu0 %v359
    %v490 = vpop.f32.mrf.mxu0
    %v491 = vadd.f32 0.0, %v490
    %492 = vmatmul.f32.gmra.mxu0 %v362
    %v493 = vpop.f32.mrf.mxu0
    %v494 = vadd.f32 0.0, %v493
    %495 = vmatmul.f32.gmra.mxu0 %v365
    %v496 = vpop.f32.mrf.mxu0
    %v497 = vadd.f32 0.0, %v496
    %498 = vmatmul.f32.gmra.mxu0 %v368
    %v499 = vpop.f32.mrf.mxu0
    %v500 = vadd.f32 0.0, %v499
    %501 = vdwg.mxu0
    %502 = vmatpush.msra.mxu0 0.0
    %503 = vmatpush.msra.mxu0 0.0
    %504 = vmatpush.msra.mxu0 0.0
    %505 = vmatpush.msra.mxu0 0.0
    %506 = vmatpush.msra.mxu0 0.0
    %507 = vmatpush.msra.mxu0 0.0
    %508 = vmatpush.msra.mxu0 0.0
    %509 = vmatpush.msra.mxu0 0.0
    %510 = vmatpush.msra.mxu0 %v332
    %511 = vmatpush.msra.mxu0 %v328
    %512 = vmatpush.msra.mxu0 %v324
    %513 = vmatpush.msra.mxu0 %v320
    %514 = vmatpush.msra.mxu0 %v316
    %515 = vmatpush.msra.mxu0 %v312
    %516 = vmatpush.msra.mxu0 %v308
    %517 = vmatpush.msra.mxu0 %v304
    %518 = vmatmul.f32.gmra.mxu0 %v344
    %v519 = vpop.f32.mrf.mxu0
    %v520 = vadd.f32 0.0, %v519
    %521 = vmatmul.f32.gmra.mxu0 %v347
    %v522 = vpop.f32.mrf.mxu0
    %v523 = vadd.f32 0.0, %v522
    %524 = vmatmul.f32.gmra.mxu0 %v350
    %v525 = vpop.f32.mrf.mxu0
    %v526 = vadd.f32 0.0, %v525
    %527 = vmatmul.f32.gmra.mxu0 %v353
    %v528 = vpop.f32.mrf.mxu0
    %v529 = vadd.f32 0.0, %v528
    %530 = vmatmul.f32.gmra.mxu0 %v356
    %v531 = vpop.f32.mrf.mxu0
    %v532 = vadd.f32 0.0, %v531
    %533 = vmatmul.f32.gmra.mxu0 %v359
    %v534 = vpop.f32.mrf.mxu0
    %v535 = vadd.f32 0.0, %v534
    %536 = vmatmul.f32.gmra.mxu0 %v362
    %v537 = vpop.f32.mrf.mxu0
    %v538 = vadd.f32 0.0, %v537
    %539 = vmatmul.f32.gmra.mxu0 %v365
    %v540 = vpop.f32.mrf.mxu0
    %v541 = vadd.f32 0.0, %v540
    %542 = vmatmul.f32.gmra.mxu0 %v368
    %v543 = vpop.f32.mrf.mxu0
    %v544 = vadd.f32 0.0, %v543
    %545 = vdwg.mxu0
    %v546 = vld [vmem:[%s6] sm:$0xf]
    %v547 = vperm.slane %v546, 0
    %v548 = vperm.slane %v546, 1
    %v549 = vperm.slane %v546, 2
    %v550 = vperm.slane %v546, 3
    %v551 = vld [vmem:[%s5] sm:$0xf]
    %v552 = vperm.slane %v551, 0
    %v553 = vperm.slane %v551, 1
    %v554 = vperm.slane %v551, 2
    %v555 = vperm.slane %v551, 3
    %vm556 = vcmp.ge.s32.totalorder %v547, 1
    %vm557 = vcmp.ge.s32.totalorder %v548, 1
    %vm558 = vcmp.ge.s32.totalorder %v549, 1
    %vm559 = vcmp.ge.s32.totalorder %v550, 1
    %vm560 = vcmp.le.s32.totalorder %v547, 14
    %vm561 = vcmp.le.s32.totalorder %v548, 14
    %vm562 = vcmp.le.s32.totalorder %v549, 14
    %vm563 = vcmp.le.s32.totalorder %v550, 14
    %vm564 = vcmp.ge.s32.totalorder %v552, 1
    %vm565 = vcmp.ge.s32.totalorder %v553, 1
    %vm566 = vcmp.ge.s32.totalorder %v554, 1
    %vm567 = vcmp.ge.s32.totalorder %v555, 1
    %vm568 = vcmp.le.s32.totalorder %v552, 14
    %vm569 = vcmp.le.s32.totalorder %v553, 14
    %vm570 = vcmp.le.s32.totalorder %v554, 14
    %vm571 = vcmp.le.s32.totalorder %v555, 14
    %573 = vrot.lane.b32.xlu0 %v520, 17
    %v574 = vpop.permute.xlu0 %573
    %579 = vrot.lane.b32.xlu0 %v388, 17
    %v580 = vpop.permute.xlu0 %579
    %581 = vrot.lane.b32.xlu0 %v432, 17
    %v582 = vpop.permute.xlu0 %581
    %583 = vrot.lane.b32.xlu0 %v476, 17
    %v584 = vpop.permute.xlu0 %583
    %vm585 = vcmask 138240
    %v586 = vsel %vm585, %v580, %v582
    %v587 = vsel %vm585, %v582, %v584
    %v588 = vsel %vm585, %v584, %v574
    %v593 = vsel %vm585, %v574, %v580
    %vm594 = vmand %vm556, %vm564
    %vm595 = vmand %vm557, %vm565
    %vm596 = vmand %vm558, %vm566
    %vm597 = vmand %vm559, %vm567
    %v598 = vsel %vm594, %v593, 0.0
    %v599 = vsel %vm595, %v586, 0.0
    %v600 = vsel %vm596, %v587, 0.0
    %v601 = vsel %vm597, %v588, 0.0
    %v602 = vadd.f32 %v598, 0.0
    %v603 = vadd.f32 %v599, 0.0
    %v604 = vadd.f32 %v600, 0.0
    %v605 = vadd.f32 %v601, 0.0
    %607 = vrot.lane.b32.xlu0 %v523, 16
    %v608 = vpop.permute.xlu0 %607
    %613 = vrot.lane.b32.xlu0 %v391, 16
    %v614 = vpop.permute.xlu0 %613
    %615 = vrot.lane.b32.xlu0 %v435, 16
    %v616 = vpop.permute.xlu0 %615
    %617 = vrot.lane.b32.xlu0 %v479, 16
    %v618 = vpop.permute.xlu0 %617
    %vm619 = vcmask 130048
    %v620 = vsel %vm619, %v614, %v616
    %v621 = vsel %vm619, %v616, %v618
    %v622 = vsel %vm619, %v618, %v608
    %v627 = vsel %vm619, %v608, %v614
    %v628 = vsel %vm556, %v627, 0.0
    %v629 = vsel %vm557, %v620, 0.0
    %v630 = vsel %vm558, %v621, 0.0
    %v631 = vsel %vm559, %v622, 0.0
    %v632 = vadd.f32 %v602, %v628
    %v633 = vadd.f32 %v603, %v629
    %v634 = vadd.f32 %v604, %v630
    %v635 = vadd.f32 %v605, %v631
    %637 = vrot.lane.b32.xlu0 %v526, 15
    %v638 = vpop.permute.xlu0 %637
    %643 = vrot.lane.b32.xlu0 %v394, 15
    %v644 = vpop.permute.xlu0 %643
    %645 = vrot.lane.b32.xlu0 %v438, 15
    %v646 = vpop.permute.xlu0 %645
    %647 = vrot.lane.b32.xlu0 %v482, 15
    %v648 = vpop.permute.xlu0 %647
    %vm649 = vcmask 121856
    %v650 = vsel %vm649, %v644, %v646
    %v651 = vsel %vm649, %v646, %v648
    %v652 = vsel %vm649, %v648, %v638
    %v657 = vsel %vm649, %v638, %v644
    %vm658 = vmand %vm556, %vm568
    %vm659 = vmand %vm557, %vm569
    %vm660 = vmand %vm558, %vm570
    %vm661 = vmand %vm559, %vm571
    %v662 = vsel %vm658, %v657, 0.0
    %v663 = vsel %vm659, %v650, 0.0
    %v664 = vsel %vm660, %v651, 0.0
    %v665 = vsel %vm661, %v652, 0.0
    %v666 = vadd.f32 %v632, %v662
    %v667 = vadd.f32 %v633, %v663
    %v668 = vadd.f32 %v634, %v664
    %v669 = vadd.f32 %v635, %v665
    %671 = vrot.lane.b32.xlu0 %v529, 1
    %v672 = vpop.permute.xlu0 %671
    %677 = vrot.lane.b32.xlu0 %v397, 1
    %v678 = vpop.permute.xlu0 %677
    %679 = vrot.lane.b32.xlu0 %v441, 1
    %v680 = vpop.permute.xlu0 %679
    %681 = vrot.lane.b32.xlu0 %v485, 1
    %v682 = vpop.permute.xlu0 %681
    %vm683 = vcmask 7168
    %v684 = vsel %vm683, %v678, %v680
    %v685 = vsel %vm683, %v680, %v682
    %v686 = vsel %vm683, %v682, %v672
    %v691 = vsel %vm683, %v672, %v678
    %v692 = vsel %vm564, %v691, 0.0
    %v693 = vsel %vm565, %v684, 0.0
    %v694 = vsel %vm566, %v685, 0.0
    %v695 = vsel %vm567, %v686, 0.0
    %v696 = vadd.f32 %v666, %v692
    %v697 = vadd.f32 %v667, %v693
    %v698 = vadd.f32 %v668, %v694
    %v699 = vadd.f32 %v669, %v695
    %v700 = vadd.f32 %v696, %v400
    %v701 = vadd.f32 %v697, %v444
    %v702 = vadd.f32 %v698, %v488
    %v703 = vadd.f32 %v699, %v532
    %708 = vrot.lane.b32.xlu0 %v403, 127
    %v709 = vpop.permute.xlu0 %708
    %710 = vrot.lane.b32.xlu0 %v447, 127
    %v711 = vpop.permute.xlu0 %710
    %712 = vrot.lane.b32.xlu0 %v491, 127
    %v713 = vpop.permute.xlu0 %712
    %714 = vrot.lane.b32.xlu0 %v535, 127
    %v715 = vpop.permute.xlu0 %714
    %vm716 = vcmask 1039360
    %v717 = vsel %vm716, %v709, %v711
    %v718 = vsel %vm716, %v711, %v713
    %v719 = vsel %vm716, %v713, %v715
    %v725 = vsel %vm716, %v715, %v709
    %v726 = vsel %vm568, %v717, 0.0
    %v727 = vsel %vm569, %v718, 0.0
    %v728 = vsel %vm570, %v719, 0.0
    %v729 = vsel %vm571, %v725, 0.0
    %v730 = vadd.f32 %v700, %v726
    %v731 = vadd.f32 %v701, %v727
    %v732 = vadd.f32 %v702, %v728
    %v733 = vadd.f32 %v703, %v729
    %738 = vrot.lane.b32.xlu0 %v406, 113
    %v739 = vpop.permute.xlu0 %738
    %740 = vrot.lane.b32.xlu0 %v450, 113
    %v741 = vpop.permute.xlu0 %740
    %742 = vrot.lane.b32.xlu0 %v494, 113
    %v743 = vpop.permute.xlu0 %742
    %744 = vrot.lane.b32.xlu0 %v538, 113
    %v745 = vpop.permute.xlu0 %744
    %vm746 = vcmask 924672
    %v747 = vsel %vm746, %v739, %v741
    %v748 = vsel %vm746, %v741, %v743
    %v749 = vsel %vm746, %v743, %v745
    %v755 = vsel %vm746, %v745, %v739
    %vm756 = vmand %vm560, %vm564
    %vm757 = vmand %vm561, %vm565
    %vm758 = vmand %vm562, %vm566
    %vm759 = vmand %vm563, %vm567
    %v760 = vsel %vm756, %v747, 0.0
    %v761 = vsel %vm757, %v748, 0.0
    %v762 = vsel %vm758, %v749, 0.0
    %v763 = vsel %vm759, %v755, 0.0
    %v764 = vadd.f32 %v730, %v760
    %v765 = vadd.f32 %v731, %v761
    %v766 = vadd.f32 %v732, %v762
    %v767 = vadd.f32 %v733, %v763
    %772 = vrot.lane.b32.xlu0 %v409, 112
    %v773 = vpop.permute.xlu0 %772
    %774 = vrot.lane.b32.xlu0 %v453, 112
    %v775 = vpop.permute.xlu0 %774
    %776 = vrot.lane.b32.xlu0 %v497, 112
    %v777 = vpop.permute.xlu0 %776
    %778 = vrot.lane.b32.xlu0 %v541, 112
    %v779 = vpop.permute.xlu0 %778
    %vm780 = vcmask 916480
    %v781 = vsel %vm780, %v773, %v775
    %v782 = vsel %vm780, %v775, %v777
    %v783 = vsel %vm780, %v777, %v779
    %v789 = vsel %vm780, %v779, %v773
    %v790 = vsel %vm560, %v781, 0.0
    %v791 = vsel %vm561, %v782, 0.0
    %v792 = vsel %vm562, %v783, 0.0
    %v793 = vsel %vm563, %v789, 0.0
    %v794 = vadd.f32 %v764, %v790
    %v795 = vadd.f32 %v765, %v791
    %v796 = vadd.f32 %v766, %v792
    %v797 = vadd.f32 %v767, %v793
    %802 = vrot.lane.b32.xlu0 %v412, 111
    %v803 = vpop.permute.xlu0 %802
    %804 = vrot.lane.b32.xlu0 %v456, 111
    %v805 = vpop.permute.xlu0 %804
    %806 = vrot.lane.b32.xlu0 %v500, 111
    %v807 = vpop.permute.xlu0 %806
    %808 = vrot.lane.b32.xlu0 %v544, 111
    %v809 = vpop.permute.xlu0 %808
    %vm810 = vcmask 908288
    %v811 = vsel %vm810, %v803, %v805
    %v812 = vsel %vm810, %v805, %v807
    %v813 = vsel %vm810, %v807, %v809
    %v819 = vsel %vm810, %v809, %v803
    %vm820 = vmand %vm560, %vm568
    %vm821 = vmand %vm561, %vm569
    %vm822 = vmand %vm562, %vm570
    %vm823 = vmand %vm563, %vm571
    %v824 = vsel %vm820, %v811, 0.0
    %v825 = vsel %vm821, %v812, 0.0
    %v826 = vsel %vm822, %v813, 0.0
    %v827 = vsel %vm823, %v819, 0.0
    %v828 = vadd.f32 %v794, %v824
    %v829 = vadd.f32 %v795, %v825
    %v830 = vadd.f32 %v796, %v826
    %v831 = vadd.f32 %v797, %v827
    %v832 = vld [vmem:[%s4] sm:$0xff]
    %834 = vset.pattern.permute.xlu0 0
    %835 = vperm.xlu0 %834, %v832
    %v836 = vpop.permute.xlu0 %835
    %v838 = vadd.f32 %v828, %v836
    %v839 = vadd.f32 %v829, %v836
    %v840 = vadd.f32 %v830, %v836
    %v841 = vadd.f32 %v831, %v836
    %842 = vst [vmem:[#allocation2] sm:$0xff] %v838
    %843 = vst [vmem:[#allocation2 + $0x8] sm:$0xff] %v839
    %844 = vst [vmem:[#allocation2 + $0x10] sm:$0xff] %v840
    %845 = vst [vmem:[#allocation2 + $0x18] sm:$0xff] %v841
    // Predicated region
    $region30: #{tpu_custom_call.1} parent=1 // pred_check
      _
    $region31: #{tpu_custom_call.1} parent=1 // pred_check_branch
      %847 = sbr.rel (0) target = $region33
    $region32: #{tpu_custom_call.1} parent=1 // pred_region
      %849 = vsyncadd [#allocation3], 0
      %s851 = sshll.u32 [#allocation2], 4
      %s852 = int_to_ptr.vmem [resolvable:$true] %s851
      %s853 = sshll.u32 %s7, 4
      %s854 = int_to_ptr.hbm [resolvable:$true] %s853
      %856 = dma.vmem_to_hbm [thread:$0]  %s852, 512, %s854, [#allocation3]
    $region33: #{tpu_custom_call.1} parent=1 // pred_fallthru
      _
    // Predicated region
    $region34: #{tpu_custom_call.1} parent=1 // pred_check
      _
    $region35: #{tpu_custom_call.1} parent=1 // pred_check_branch
      %858 = sbr.rel (0) target = $region37
    $region36: #{tpu_custom_call.1} parent=1 // pred_region
      %860 = dma.done [#allocation3], 512
    $region37: #{tpu_custom_call.1} parent=1 // pred_fallthru
      _
    %861 = vsyncpa [#allocation3], 1

</llo_original>
